<compile_context>
chip_gen: v7x
topology: tpu7x:2x2x1
jax: 0.10.0
libtpu: 0.0.40
codegen_flags: <defaults>
</compile_context>

<pallas_src>
import functools

import jax
import jax.numpy as jnp
from jax.experimental import pallas as pl
from jax.experimental.pallas import tpu as pltpu


def _round_up(x, m):
    return ((x + m - 1) // m) * m


def _ce_kernel(logits_ref, target_ref, sum_ref, cnt_ref, *, ignore_label, hw, tile_p):
    """One (C, tile_p) pixel tile of cross-entropy (no per-class weights).

    logits_ref: (1, C, tile_p)  logits; classes on sublanes, pixels on lanes
    target_ref: (1, 1, tile_p)  int32 labels
    sum_ref, cnt_ref: (1, 1, tile_p) f32 lane-wise accumulators, resident across the
        pixel-tile grid axis; reduced to scalars in plain JAX afterwards.
    """
    i = pl.program_id(1)

    @pl.when(i == 0)
    def _init():
        sum_ref[...] = jnp.zeros_like(sum_ref)
        cnt_ref[...] = jnp.zeros_like(cnt_ref)

    logits = logits_ref[0].astype(jnp.float32)      # (C, TP) f32 (upcast from bf16)
    tgt = target_ref[0]                             # (1, TP) int32

    # numerically stable log-sum-exp over the class (sublane) axis
    m = jnp.max(logits, axis=0, keepdims=True)                                   # (1, TP)
    lse = m + jnp.log(jnp.sum(jnp.exp(logits - m), axis=0, keepdims=True))       # (1, TP)

    # gather the target-class logit via a one-hot compare (no dynamic gather on TPU)
    cls_ids = jax.lax.broadcasted_iota(jnp.int32, logits.shape, 0)               # (C, TP)
    picked = jnp.sum(jnp.where(cls_ids == tgt, logits, 0.0), axis=0, keepdims=True)

    # mask out ignore_index pixels and the out-of-bounds tail of the last tile
    pix = i * tile_p + jax.lax.broadcasted_iota(jnp.int32, (1, tile_p), 1)
    valid = jnp.logical_and(tgt != ignore_label, pix < hw)                       # (1, TP)

    loss = jnp.where(valid, lse - picked, 0.0)                                   # (1, TP)
    sum_ref[0] += loss
    cnt_ref[0] += valid.astype(jnp.float32)


def _cross_entropy_mean(logits_ncp, target_n1p, ignore_label, *, max_tile_p=8192):
    """Mean CE over non-ignored pixels.

    logits_ncp: (N, C, H*W)   target_n1p: (N, 1, H*W) int32
    """
    n, c, hw = logits_ncp.shape
    tile_p = min(max_tile_p, _round_up(hw, 128))
    num_tiles = pl.cdiv(hw, tile_p)

    kernel = functools.partial(
        _ce_kernel, ignore_label=ignore_label, hw=hw, tile_p=tile_p
    )
    sums, cnts = pl.pallas_call(
        kernel,
        out_shape=(
            jax.ShapeDtypeStruct((n, 1, tile_p), jnp.float32),
            jax.ShapeDtypeStruct((n, 1, tile_p), jnp.float32),
        ),
        grid_spec=pltpu.PrefetchScalarGridSpec(
            num_scalar_prefetch=0,
            grid=(n, num_tiles),
            in_specs=[
                pl.BlockSpec((1, c, tile_p), lambda b, i: (b, 0, i)),
                pl.BlockSpec((1, 1, tile_p), lambda b, i: (b, 0, i)),
            ],
            out_specs=(
                pl.BlockSpec((1, 1, tile_p), lambda b, i: (b, 0, 0)),
                pl.BlockSpec((1, 1, tile_p), lambda b, i: (b, 0, 0)),
            ),
        ),
        compiler_params=pltpu.CompilerParams(
            # batch axis is independent (megacore-shardable on v7x); the pixel-tile
            # axis carries the resident lane accumulators so it stays "arbitrary".
            dimension_semantics=("parallel", "arbitrary"),
        ),
    )(logits_ncp, target_n1p)

    total = jnp.sum(sums, dtype=jnp.float32)
    count = jnp.sum(cnts, dtype=jnp.float32)
    # 'mean' reduction of nn.CrossEntropyLoss (weight=None): sum over valid / #valid
    # (count == 0 -> nan, matching PyTorch behavior).
    return total / count


def _resize_bilinear_nchw(x, out_hw):
    """F.interpolate(mode='bilinear', align_corners=False) equivalent (plain-JAX glue)."""
    n, c, h, w = x.shape
    if (h, w) == tuple(out_hw):
        return x
    # TODO(synk): jax.image.resize antialiases on downsampling (PyTorch does not);
    # DDRNet aux heads only ever upsample to the target resolution, so paths match.
    return jax.image.resize(x, (n, c, out_hw[0], out_hw[1]), method="linear")


def _head_loss(score, target_n1p, hw_shape, ignore_label, compute_dtype):
    h, w = hw_shape
    score = _resize_bilinear_nchw(score, (h, w))
    n, c = score.shape[0], score.shape[1]
    # NCHW -> (N, C, H*W) is a free contiguous reshape: pixels land on the lane axis.
    # Cast to bf16 (fuses into the resize fusion) to halve the dominant HBM stream;
    # the kernel accumulates in f32.
    logits = score.reshape(n, c, h * w).astype(compute_dtype)
    return _cross_entropy_mean(logits, target_n1p, ignore_label)


def _ddrnet_ce(scores, target, *, ignore_label, compute_dtype, head_weights):
    n, h, w = target.shape
    target_n1p = target.reshape(n, 1, h * w).astype(jnp.int32)
    total = 0.0
    for wgt, s in zip(head_weights, scores):
        total = total + wgt * _head_loss(s, target_n1p, (h, w), ignore_label, compute_dtype)
    return total


class CrossEntropy:
    def __init__(self, ignore_label=-1, weight=None, compute_dtype=jnp.bfloat16):
        # TODO(synk): per-class `weight` not supported (DDRNet uses weight=None)
        assert weight is None
        self.ignore_label = ignore_label
        self.compute_dtype = compute_dtype
        self._head_weights = (1.0, 0.4)
        # Jit the whole forward (resize + both heads + combine) as one program.
        self._fn = jax.jit(
            functools.partial(
                _ddrnet_ce,
                ignore_label=ignore_label,
                compute_dtype=compute_dtype,
                head_weights=self._head_weights,
            )
        )

    def __call__(self, score, target):
        assert len(self._head_weights) == len(score)
        return self._fn(tuple(score), target)


if __name__ == "__main__":
    key = jax.random.PRNGKey(0)
    k0, k1, k2, k3 = jax.random.split(key, 4)

    N, C, H, W = 2, 8, 16, 16
    # main head at full resolution, aux head at half resolution (exercises bilinear resize)
    score0 = jax.random.normal(k0, (N, C, H, W), dtype=jnp.float32)
    score1 = jax.random.normal(k1, (N, C, H // 2, W // 2), dtype=jnp.float32)

    target = jax.random.randint(k2, (N, H, W), 0, C, dtype=jnp.int32)
    # sprinkle some ignore_label (-1) pixels
    ignore_mask = jax.random.uniform(k3, (N, H, W)) < 0.1
    target = jnp.where(ignore_mask, -1, target)

    loss_fn = CrossEntropy(ignore_label=-1, weight=None)
    loss = loss_fn([score0, score1], target)
    jax.block_until_ready(loss)
    assert loss.shape == () and bool(jnp.isfinite(loss))
    print("KERNEL_OK")
</pallas_src>

<mosaic_0001>
module attributes {stable_mosaic.version = 11 : i64} {
  func.func @_ce_kernel(%arg0: i32, %arg1: i32, %arg2: memref<1x8x256xbf16, #tpu.memory_space<vmem>>, %arg3: memref<1x1x256xi32, #tpu.memory_space<vmem>>, %arg4: memref<1x1x256xf32, #tpu.memory_space<vmem>>, %arg5: memref<1x1x256xf32, #tpu.memory_space<vmem>>) attributes {dimension_semantics = [#tpu.dimension_semantics<parallel>, #tpu.dimension_semantics<arbitrary>], iteration_bounds = array<i64: 2, 1>, scalar_prefetch = 0 : i64, scratch_operands = 0 : i64, tpu.core_type = #tpu.core_type<tc>, window_params = [{transform_indices = @transform_0, window_bounds = array<i64: 1, 8, 256>}, {transform_indices = @transform_1, window_bounds = array<i64: 1, 1, 256>}, {transform_indices = @transform_2, window_bounds = array<i64: 1, 1, 256>}, {transform_indices = @transform_3, window_bounds = array<i64: 1, 1, 256>}]} {
    %c0_i32 = arith.constant 0 : i32
    %0 = arith.cmpi eq, %arg1, %c0_i32 : i32
    %1 = arith.extui %0 : i1 to i32
    %c0_i32_0 = arith.constant 0 : i32
    %2 = arith.cmpi ne, %1, %c0_i32_0 : i32
    scf.if %2 {
      %cst_23 = arith.constant 0.000000e+00 : f32
      %50 = vector.broadcast %cst_23 : f32 to vector<1x1x256xf32>
      %c0_24 = arith.constant 0 : index
      %c0_25 = arith.constant 0 : index
      %c0_26 = arith.constant 0 : index
      %51 = vector.load %arg4[%c0_24, %c0_25, %c0_26] : memref<1x1x256xf32, #tpu.memory_space<vmem>>, vector<1x1x256xf32>
      tpu.vector_store %arg4[%c0_24, %c0_25, %c0_26], %50 {strides = array<i32>} : memref<1x1x256xf32, #tpu.memory_space<vmem>>, vector<1x1x256xf32>,
      %cst_27 = arith.constant 0.000000e+00 : f32
      %52 = vector.broadcast %cst_27 : f32 to vector<1x1x256xf32>
      %c0_28 = arith.constant 0 : index
      %c0_29 = arith.constant 0 : index
      %c0_30 = arith.constant 0 : index
      %53 = vector.load %arg5[%c0_28, %c0_29, %c0_30] : memref<1x1x256xf32, #tpu.memory_space<vmem>>, vector<1x1x256xf32>
      tpu.vector_store %arg5[%c0_28, %c0_29, %c0_30], %52 {strides = array<i32>} : memref<1x1x256xf32, #tpu.memory_space<vmem>>, vector<1x1x256xf32>,
    } else {
    }
    %c0 = arith.constant 0 : index
    %c0_1 = arith.constant 0 : index
    %c0_2 = arith.constant 0 : index
    %3 = vector.load %arg2[%c0, %c0_1, %c0_2] : memref<1x8x256xbf16, #tpu.memory_space<vmem>>, vector<1x8x256xbf16>
    %4 = vector.shape_cast %3 : vector<1x8x256xbf16> to vector<8x256xbf16>
    %5 = arith.extf %4 : vector<8x256xbf16> to vector<8x256xf32>
    %c0_3 = arith.constant 0 : index
    %c0_4 = arith.constant 0 : index
    %c0_5 = arith.constant 0 : index
    %6 = vector.load %arg3[%c0_3, %c0_4, %c0_5] : memref<1x1x256xi32, #tpu.memory_space<vmem>>, vector<1x1x256xi32>
    %7 = vector.shape_cast %6 : vector<1x1x256xi32> to vector<1x256xi32>
    %cst = arith.constant dense<0xFF800000> : vector<256xf32>
    %8 = vector.multi_reduction <maximumf>, %5, %cst [0] : vector<8x256xf32> to vector<256xf32>
    %9 = vector.shape_cast %8 : vector<256xf32> to vector<1x256xf32>
    %10 = vector.broadcast %9 : vector<1x256xf32> to vector<8x256xf32>
    %11 = arith.subf %5, %10 : vector<8x256xf32>
    %12 = math.exp %11 : vector<8x256xf32>
    %cst_6 = arith.constant dense<0.000000e+00> : vector<256xf32>
    %13 = vector.multi_reduction <add>, %12, %cst_6 [0] : vector<8x256xf32> to vector<256xf32>
    %14 = vector.shape_cast %13 : vector<256xf32> to vector<1x256xf32>
    %15 = math.log %14 : vector<1x256xf32>
    %16 = arith.addf %9, %15 : vector<1x256xf32>
    %17 = tpu.iota {dimensions = array<i32: 0>} : vector<8x256xi32>
    %18 = vector.broadcast %7 : vector<1x256xi32> to vector<8x256xi32>
    %19 = arith.cmpi eq, %17, %18 : vector<8x256xi32>
    %cst_7 = arith.constant 0.000000e+00 : f32
    %20 = vector.broadcast %cst_7 : f32 to vector<8x256xf32>
    %21 = arith.select %19, %5, %20 : vector<8x256xi1>, vector<8x256xf32>
    %cst_8 = arith.constant dense<0.000000e+00> : vector<256xf32>
    %22 = vector.multi_reduction <add>, %21, %cst_8 [0] : vector<8x256xf32> to vector<256xf32>
    %23 = vector.shape_cast %22 : vector<256xf32> to vector<1x256xf32>
    %c256_i32 = arith.constant 256 : i32
    %24 = arith.muli %arg1, %c256_i32 : i32
    %25 = tpu.iota {dimensions = array<i32: 1>} : vector<1x256xi32>
    %26 = vector.broadcast %24 : i32 to vector<1x256xi32>
    %27 = arith.addi %26, %25 : vector<1x256xi32>
    %c-1_i32 = arith.constant -1 : i32
    %28 = vector.broadcast %c-1_i32 : i32 to vector<1x256xi32>
    %29 = arith.cmpi ne, %7, %28 : vector<1x256xi32>
    %c256_i32_9 = arith.constant 256 : i32
    %30 = vector.broadcast %c256_i32_9 : i32 to vector<1x256xi32>
    %31 = arith.cmpi slt, %27, %30 : vector<1x256xi32>
    %32 = arith.andi %29, %31 : vector<1x256xi1>
    %33 = arith.subf %16, %23 : vector<1x256xf32>
    %cst_10 = arith.constant 0.000000e+00 : f32
    %34 = vector.broadcast %cst_10 : f32 to vector<1x256xf32>
    %35 = arith.select %32, %33, %34 : vector<1x256xi1>, vector<1x256xf32>
    %c0_11 = arith.constant 0 : index
    %c0_12 = arith.constant 0 : index
    %c0_13 = arith.constant 0 : index
    %36 = vector.load %arg4[%c0_11, %c0_12, %c0_13] : memref<1x1x256xf32, #tpu.memory_space<vmem>>, vector<1x1x256xf32>
    %37 = vector.shape_cast %36 : vector<1x1x256xf32> to vector<1x256xf32>
    %38 = arith.addf %37, %35 : vector<1x256xf32>
    %c0_14 = arith.constant 0 : index
    %c0_15 = arith.constant 0 : index
    %c0_16 = arith.constant 0 : index
    %39 = vector.load %arg4[%c0_14, %c0_15, %c0_16] : memref<1x1x256xf32, #tpu.memory_space<vmem>>, vector<1x1x256xf32>
    %40 = vector.shape_cast %39 : vector<1x1x256xf32> to vector<1x256xf32>
    %41 = vector.shape_cast %38 : vector<1x256xf32> to vector<1x1x256xf32>
    tpu.vector_store %arg4[%c0_14, %c0_15, %c0_16], %41 {strides = array<i32>} : memref<1x1x256xf32, #tpu.memory_space<vmem>>, vector<1x1x256xf32>,
    %c0_17 = arith.constant 0 : index
    %c0_18 = arith.constant 0 : index
    %c0_19 = arith.constant 0 : index
    %42 = vector.load %arg5[%c0_17, %c0_18, %c0_19] : memref<1x1x256xf32, #tpu.memory_space<vmem>>, vector<1x1x256xf32>
    %43 = vector.shape_cast %42 : vector<1x1x256xf32> to vector<1x256xf32>
    %44 = arith.extui %32 : vector<1x256xi1> to vector<1x256xi32>
    %45 = arith.sitofp %44 : vector<1x256xi32> to vector<1x256xf32>
    %46 = arith.addf %43, %45 : vector<1x256xf32>
    %c0_20 = arith.constant 0 : index
    %c0_21 = arith.constant 0 : index
    %c0_22 = arith.constant 0 : index
    %47 = vector.load %arg5[%c0_20, %c0_21, %c0_22] : memref<1x1x256xf32, #tpu.memory_space<vmem>>, vector<1x1x256xf32>
    %48 = vector.shape_cast %47 : vector<1x1x256xf32> to vector<1x256xf32>
    %49 = vector.shape_cast %46 : vector<1x256xf32> to vector<1x1x256xf32>
    tpu.vector_store %arg5[%c0_20, %c0_21, %c0_22], %49 {strides = array<i32>} : memref<1x1x256xf32, #tpu.memory_space<vmem>>, vector<1x1x256xf32>,
    return
  }
  func.func @transform_0(%arg0: i32, %arg1: i32) -> (i32, i32, i32) {
    %c0_i32 = arith.constant 0 : i32
    %c0_i32_0 = arith.constant 0 : i32
    return %arg0, %c0_i32, %arg1 : i32, i32, i32
  }
  func.func @transform_1(%arg0: i32, %arg1: i32) -> (i32, i32, i32) {
    %c0_i32 = arith.constant 0 : i32
    %c0_i32_0 = arith.constant 0 : i32
    return %arg0, %c0_i32, %arg1 : i32, i32, i32
  }
  func.func @transform_2(%arg0: i32, %arg1: i32) -> (i32, i32, i32) {
    %c0_i32 = arith.constant 0 : i32
    %c0_i32_0 = arith.constant 0 : i32
    %c0_i32_1 = arith.constant 0 : i32
    return %arg0, %c0_i32, %c0_i32_0 : i32, i32, i32
  }
  func.func @transform_3(%arg0: i32, %arg1: i32) -> (i32, i32, i32) {
    %c0_i32 = arith.constant 0 : i32
    %c0_i32_0 = arith.constant 0 : i32
    %c0_i32_1 = arith.constant 0 : i32
    return %arg0, %c0_i32, %c0_i32_0 : i32, i32, i32
  }
}

</mosaic_0001>

<llo_original>
// kernel: _ddrnet_ce.3
$region0: #{_ddrnet_ce.3}
  #allocation0 [shape = 'u32[]', space=smem, size = 0x4, offset = 0x4, fixed_abs, tag = 'smem constant byte address 0x4 - core index']
  #allocation1 [shape = 'u32[144,128]{1,0:T(1,128)}', space=vmem, size = 0x12000, scoped, tag = 'internal scratch']
  %s0 = inlined_call_operand.vmem [shape: bf16[2,8,256], index: 0, kind: input, shape index: {}]
  %s1 = inlined_call_operand.vmem [shape: s32[2,1,256], index: 1, kind: input, shape index: {}]
  %s2 = inlined_call_operand.vmem [shape: f32[2,1,256], index: 2, kind: output, shape index: {0}]
  %s3 = inlined_call_operand.vmem [shape: f32[2,1,256], index: 3, kind: output, shape index: {1}]
  %4 = xla_tuple %s2, %s3
  %s5 = sld [smem:[#allocation0]]
  $region53: #{_ddrnet_ce.3} parent=0
    _
  %s7 = ssub.s32 1, %s5
  %s8 = scalar_select 0, %s7, %s5
  loop: start=0, step=1, limit=4
  $region2: #{_ddrnet_ce.3} parent=0 // loop_pre_header
    _
  $region3: #{_ddrnet_ce.3} parent=0 // loop_header
    %s10 = sphi 0, %s14
    %p11 = scmp.ge.s32.totalorder %s10, 4
    %s17 = sphi 0, %s29
    %s18 = sphi 0, %s25
    %s19 = sphi 0, %s17
    %s20 = sphi 0, %s18
    %s21 = sphi 0, %s19
    %s22 = sphi 0, %s20
    %s34 = sphi 0, %s36
    %s37 = sphi 0, %s34
    %s38 = sphi 0, %s37
    %s54 = sphi 0, %s38
    %s62 = sphi 0, %s64
    %s65 = sphi 0, %s62
    %s66 = sphi 0, %s65
    %s82 = sphi 0, %s66
    %s88 = sphi 0, %s90
    %s91 = sphi 0, %s88
    %s92 = sphi 0, %s91
    %s108 = sphi 0, %s92
    %s114 = sphi 0, %s116
    %s117 = sphi 0, %s114
    %s118 = sphi 0, %s117
    %s134 = sphi 0, %s118
  $region4: #{_ddrnet_ce.3} parent=0 // loop_header_branch
    %13 = sbr.rel (%p11) target = $region8
  $region5: #{_ddrnet_ce.3} parent=0 // loop_body
    %s15 = ssub.s32 %s10, 1
    %s16 = ssub.s32 %s10, 2
    %s23 = sadd.s32 1, %s18
    %p24 = scmp.ge.s32.totalorder %s23, 1
    %s25 = scalar_select %p24, 0, %s23
    %s26 = sadd.s32 1, %s17
    %s27 = scalar_select %p24, %s26, %s17
    %p28 = scmp.ge.s32.totalorder %s27, 2
    %s29 = scalar_select %p28, 0, %s27
    %s30 = ssub.s32 %s17, %s29
    %s31 = ssub.s32 %s18, %s25
    %s32 = sor.u32 %s30, %s31
    %p33 = scmp.eq.s32.totalorder %s32, 0
    %s35 = sadd.s32 %s34, 1
    %s36 = scalar_select %p33, %s34, %s35
    %p39 = pneg %p33
    %p40 = scmp.eq.s32.totalorder %s10, 1
    %p41 = por %p39, %p40
    %p42 = scmp.ne.s32.totalorder %s34, %s37
    %p43 = scmp.eq.s32.totalorder %s10, 0
    %p44 = por %p42, %p43
    %p45 = scmp.ne.s32.totalorder %s34, %s37
    %p46 = scmp.eq.s32.totalorder %s15, 1
    %p47 = por %p45, %p46
    %p48 = scmp.ne.s32.totalorder %s37, %s38
    %p49 = scmp.eq.s32.totalorder %s15, 0
    %p50 = por %p48, %p49
    %p51 = scmp.ne.s32.totalorder %s37, %s38
    %p52 = scmp.eq.s32.totalorder %s16, 1
    %p53 = por %p51, %p52
    %p55 = scmp.ne.s32.totalorder %s38, %s54
    %p56 = scmp.eq.s32.totalorder %s16, 0
    %p57 = por %p55, %p56
    %s58 = ssub.s32 %s17, %s29
    %s59 = ssub.s32 %s18, %s25
    %s60 = sor.u32 %s58, %s59
    %p61 = scmp.eq.s32.totalorder %s60, 0
    %s63 = sadd.s32 %s62, 1
    %s64 = scalar_select %p61, %s62, %s63
    %p67 = pneg %p61
    %p68 = scmp.eq.s32.totalorder %s10, 1
    %p69 = por %p67, %p68
    %p70 = scmp.ne.s32.totalorder %s62, %s65
    %p71 = scmp.eq.s32.totalorder %s10, 0
    %p72 = por %p70, %p71
    %p73 = scmp.ne.s32.totalorder %s62, %s65
    %p74 = scmp.eq.s32.totalorder %s15, 1
    %p75 = por %p73, %p74
    %p76 = scmp.ne.s32.totalorder %s65, %s66
    %p77 = scmp.eq.s32.totalorder %s15, 0
    %p78 = por %p76, %p77
    %p79 = scmp.ne.s32.totalorder %s65, %s66
    %p80 = scmp.eq.s32.totalorder %s16, 1
    %p81 = por %p79, %p80
    %p83 = scmp.ne.s32.totalorder %s66, %s82
    %p84 = scmp.eq.s32.totalorder %s16, 0
    %p85 = por %p83, %p84
    %s86 = ssub.s32 %s17, %s29
    %p87 = scmp.eq.s32.totalorder %s86, 0
    %s89 = sadd.s32 %s88, 1
    %s90 = scalar_select %p87, %s88, %s89
    %p93 = pneg %p87
    %p94 = scmp.eq.s32.totalorder %s10, 1
    %p95 = por %p93, %p94
    %p96 = scmp.ne.s32.totalorder %s88, %s91
    %p97 = scmp.eq.s32.totalorder %s10, 0
    %p98 = por %p96, %p97
    %p99 = scmp.ne.s32.totalorder %s88, %s91
    %p100 = scmp.eq.s32.totalorder %s15, 1
    %p101 = por %p99, %p100
    %p102 = scmp.ne.s32.totalorder %s91, %s92
    %p103 = scmp.eq.s32.totalorder %s15, 0
    %p104 = por %p102, %p103
    %p105 = scmp.ne.s32.totalorder %s91, %s92
    %p106 = scmp.eq.s32.totalorder %s16, 1
    %p107 = por %p105, %p106
    %p109 = scmp.ne.s32.totalorder %s92, %s108
    %p110 = scmp.eq.s32.totalorder %s16, 0
    %p111 = por %p109, %p110
    %s112 = ssub.s32 %s17, %s29
    %p113 = scmp.eq.s32.totalorder %s112, 0
    %s115 = sadd.s32 %s114, 1
    %s116 = scalar_select %p113, %s114, %s115
    %p119 = pneg %p113
    %p120 = scmp.eq.s32.totalorder %s10, 1
    %p121 = por %p119, %p120
    %p122 = scmp.ne.s32.totalorder %s114, %s117
    %p123 = scmp.eq.s32.totalorder %s10, 0
    %p124 = por %p122, %p123
    %p125 = scmp.ne.s32.totalorder %s114, %s117
    %p126 = scmp.eq.s32.totalorder %s15, 1
    %p127 = por %p125, %p126
    %p128 = scmp.ne.s32.totalorder %s117, %s118
    %p129 = scmp.eq.s32.totalorder %s15, 0
    %p130 = por %p128, %p129
    %p131 = scmp.ne.s32.totalorder %s117, %s118
    %p132 = scmp.eq.s32.totalorder %s16, 1
    %p133 = por %p131, %p132
    %p135 = scmp.ne.s32.totalorder %s118, %s134
    %p136 = scmp.eq.s32.totalorder %s16, 0
    %p137 = por %p135, %p136
    %p138 = scmp.le.s32.totalorder 1, %s10
    %p139 = scmp.lt.s32.totalorder %s10, 3
    %p140 = pnand %p138, %p139
    %p141 = pneg %p140
    // Predicated region
    $region9: #{_ddrnet_ce.3} parent=5 // pred_check
      _
    $region10: #{_ddrnet_ce.3} parent=5 // pred_check_branch
      %143 = sbr.rel (%p140) target = $region12
    $region11: #{_ddrnet_ce.3} parent=5 // pred_region
      %s144 = ssub.s32 %s10, 1
    $region12: #{_ddrnet_ce.3} parent=5 // pred_fallthru
      _
    %p145 = scmp.lt.s32.totalorder %s10, 2
    // Predicated region
    $region13: #{_ddrnet_ce.3} parent=5 // pred_check
      %p146 = pneg %p145
    $region14: #{_ddrnet_ce.3} parent=5 // pred_check_branch
      %148 = sbr.rel (%p146) target = $region16
    $region15: #{_ddrnet_ce.3} parent=5 // pred_region
      // Predicated region
      $region17: #{_ddrnet_ce.3} parent=15 // pred_check
        %p149 = pneg %p44
      $region18: #{_ddrnet_ce.3} parent=15 // pred_check_branch
        %151 = sbr.rel (%p149) target = $region20
      $region19: #{_ddrnet_ce.3} parent=15 // pred_region
        %s152 = smul.u32 2, %s18
        %p153 = scmp.lt.s32.totalorder %s17, 1
        %s154 = scalar_select %p153, %s17, 1
        %p155 = scmp.lt.s32.totalorder %s152, 1
        %s156 = scalar_select %p155, %s152, 1
        %s157 = smul.addr %s154, 2
        %s158 = sadd.s32 %s156, %s157
        %s159 = smul.addr %s158, 4
        %s160 = scalar_lea.vmem %s0, %s159
        %s161 = smul.u32 2, %s18
      $region20: #{_ddrnet_ce.3} parent=15 // pred_fallthru
        _
      // Predicated region
      $region21: #{_ddrnet_ce.3} parent=15 // pred_check
        %p162 = pneg %p72
      $region22: #{_ddrnet_ce.3} parent=15 // pred_check_branch
        %164 = sbr.rel (%p162) target = $region24
      $region23: #{_ddrnet_ce.3} parent=15 // pred_region
        %s165 = smul.u32 2, %s18
        %p166 = scmp.lt.s32.totalorder %s17, 1
        %s167 = scalar_select %p166, %s17, 1
        %p168 = scmp.lt.s32.totalorder %s165, 1
        %s169 = scalar_select %p168, %s165, 1
        %s170 = smul.addr %s167, 2
        %s171 = sadd.s32 %s169, %s170
        %s172 = scalar_lea.vmem %s1, %s171
        %s173 = smul.u32 2, %s18
      $region24: #{_ddrnet_ce.3} parent=15 // pred_fallthru
        _
    $region16: #{_ddrnet_ce.3} parent=5 // pred_fallthru
      _
    %p174 = scmp.le.s32.totalorder 1, %s10
    %p175 = scmp.lt.s32.totalorder %s10, 3
    %p176 = pnand %p174, %p175
    %p177 = pneg %p176
    // Predicated region
    $region25: #{_ddrnet_ce.3} parent=5 // pred_check
      _
    $region26: #{_ddrnet_ce.3} parent=5 // pred_check_branch
      %179 = sbr.rel (%p176) target = $region28
    $region27: #{_ddrnet_ce.3} parent=5 // pred_region
      %s180 = ssub.s32 %s10, 1
      %s181 = smul.u32 2, %s20
      %p182 = scmp.lt.s32.totalorder %s19, 1
      %s183 = scalar_select %p182, %s19, 1
      %p184 = scmp.lt.s32.totalorder %s181, 1
      %s185 = scalar_select %p184, %s181, 1
      %s186 = smul.addr %s183, 2
      %s187 = sadd.s32 %s185, %s186
      %s188 = smul.addr %s187, 4
      %s189 = scalar_lea.vmem %s0, %s188
      %p190 = pneg %p50
      %p191 = pneg %p47
      %s192 = smul.u32 2, %s20
      %p193 = scmp.lt.s32.totalorder %s19, 1
      %s194 = scalar_select %p193, %s19, 1
      %p195 = scmp.lt.s32.totalorder %s192, 1
      %s196 = scalar_select %p195, %s192, 1
      %s197 = smul.addr %s194, 2
      %s198 = sadd.s32 %s196, %s197
      %s199 = scalar_lea.vmem %s1, %s198
      %p200 = pneg %p78
      %p201 = pneg %p75
      %p202 = pneg %p104
      %p203 = pneg %p101
      %p204 = scmp.lt.s32.totalorder %s19, 1
      %s205 = scalar_select %p204, %s19, 1
      %s206 = smul.addr %s205, 2
      %s207 = scalar_lea.vmem %s2, %s206
      %p208 = pneg %p130
      %p209 = pneg %p127
      %p210 = scmp.lt.s32.totalorder %s19, 1
      %s211 = scalar_select %p210, %s19, 1
      %s212 = smul.addr %s211, 2
      %s213 = scalar_lea.vmem %s3, %s212
      %s214 = smul.u32 2, %s20
      %p215 = scmp.lt.s32.totalorder %s19, 1
      %s216 = scalar_select %p215, %s19, 1
      %p217 = scmp.lt.s32.totalorder %s214, 1
      %s218 = scalar_select %p217, %s214, 1
      %s219 = smul.addr %s216, 2
      %s220 = sadd.s32 %s218, %s219
      %s221 = smul.addr %s220, 4
      %s222 = scalar_lea.vmem %s0, %s221
      %s223 = smul.u32 2, %s20
      %s224 = smul.u32 2, %s20
      %p225 = scmp.lt.s32.totalorder %s19, 1
      %s226 = scalar_select %p225, %s19, 1
      %p227 = scmp.lt.s32.totalorder %s224, 1
      %s228 = scalar_select %p227, %s224, 1
      %s229 = smul.addr %s226, 2
      %s230 = sadd.s32 %s228, %s229
      %s231 = scalar_lea.vmem %s1, %s230
      %s232 = smul.u32 2, %s20
      %p233 = scmp.lt.s32.totalorder %s19, 1
      %s234 = scalar_select %p233, %s19, 1
      %s235 = smul.addr %s234, 2
      %s236 = scalar_lea.vmem %s2, %s235
      %p237 = scmp.lt.s32.totalorder %s19, 1
      %s238 = scalar_select %p237, %s19, 1
      %s239 = smul.addr %s238, 2
      %s240 = scalar_lea.vmem %s3, %s239
      %p241 = scmp.eq.s32.totalorder %s20, 0
      // Predicated region
      $region29: #{_ddrnet_ce.3} parent=27 // pred_check
        %p242 = pneg %p241
      $region30: #{_ddrnet_ce.3} parent=27 // pred_check_branch
        %244 = sbr.rel (%p242) target = $region32
      $region31: #{_ddrnet_ce.3} parent=27 // pred_region
        %v245 = vlaneseq
        %vm246 = vcmp.ge.s32.totalorder %v245, 0
        %vm247 = vcmp.lt.s32.totalorder %v245, 256
        %vm248 = vmand %vm246, %vm247
        %249 = vst.msk [vmem:[%s236] sm:$0x3] %vm248, 0.0
        %250 = vst.msk [vmem:[%s240] sm:$0x3] %vm248, 0.0
      $region32: #{_ddrnet_ce.3} parent=27 // pred_fallthru
        _
      %v251 = vld [vmem:[%s222] sm:$0xff]
      %v252 = vunpack.c.l.bf16 %v251
      %v253 = vunpack.c.h.bf16 %v251
      %v254 = vld [vmem:[%s231] sm:$0x3]
      %v255 = vrot.slane %v252, 4
      %v256 = vmax.f32 %v252, %v255
      %v257 = vrot.slane %v256, 2
      %v258 = vmax.f32 %v256, %v257
      %v259 = vrot.slane %v258, 1
      %v260 = vmax.f32 %v258, %v259
      %v261 = vrot.slane %v253, 4
      %v262 = vmax.f32 %v253, %v261
      %v263 = vrot.slane %v262, 2
      %v264 = vmax.f32 %v262, %v263
      %v265 = vrot.slane %v264, 1
      %v266 = vmax.f32 %v264, %v265
      %v267 = vsub.f32 %v252, %v260
      %v268 = vsub.f32 %v253, %v266
      %v269 = vmul.f32 %v267, 1.442695
      %v270 = vpow.pop %v269
      %v271 = vmul.f32 %v268, 1.442695
      %v272 = vpow.pop %v271
      %v273 = vrot.slane %v270, 4
      %v274 = vadd.f32 %v270, %v273
      %v275 = vrot.slane %v274, 2
      %v276 = vadd.f32 %v274, %v275
      %v277 = vrot.slane %v276, 1
      %v278 = vadd.f32 %v276, %v277
      %v279 = vrot.slane %v272, 4
      %v280 = vadd.f32 %v272, %v279
      %v281 = vrot.slane %v280, 2
      %v282 = vadd.f32 %v280, %v281
      %v283 = vrot.slane %v282, 1
      %v284 = vadd.f32 %v282, %v283
      %v285 = vlog2.pop %v278
      %v286 = vmul.f32 %v285, 0.6931472
      %v287 = vlog2.pop %v284
      %v288 = vmul.f32 %v287, 0.6931472
      %v289 = vadd.f32 %v260, %v286
      %v290 = vadd.f32 %v266, %v288
      %v291 = vlaneseq
      %v292 = vshrl.u32 %v291, 7
      %v293 = vlaneseq
      %v294 = vshrl.u32 %v293, 7
      %v295 = vsub.s32 0, %v294
      %v296 = vrot.slane %v254, %v295
      %v297 = vlaneseq
      %v298 = vshrl.u32 %v297, 7
      %v299 = vsub.s32 1, %v298
      %v300 = vrot.slane %v254, %v299
      %vm301 = vcmp.eq.s32.totalorder %v292, %v296
      %vm302 = vcmp.eq.s32.totalorder %v292, %v300
      %v303 = vsel %vm301, %v252, 0.0
      %v304 = vsel %vm302, %v253, 0.0
      %v305 = vrot.slane %v303, 4
      %v306 = vadd.f32 %v303, %v305
      %v307 = vrot.slane %v306, 2
      %v308 = vadd.f32 %v306, %v307
      %v309 = vrot.slane %v308, 1
      %v310 = vadd.f32 %v308, %v309
      %v311 = vrot.slane %v304, 4
      %v312 = vadd.f32 %v304, %v311
      %v313 = vrot.slane %v312, 2
      %v314 = vadd.f32 %v312, %v313
      %v315 = vrot.slane %v314, 1
      %v316 = vadd.f32 %v314, %v315
      %s317 = smul.u32 %s20, 256
      %v318 = vlaneseq
      %v319 = vand.u32 %v318, 127
      %v320 = vadd.s32 %v319, 128
      %v321 = vstv %s317
      %v322 = vadd.s32 %v321, %v319
      %v323 = vadd.s32 %v321, %v320
      %vm324 = vcmp.ne.s32.totalorder %v254, 4294967295
      %vm325 = vcmp.lt.s32.totalorder %v322, 256
      %vm326 = vcmp.lt.s32.totalorder %v323, 256
      %v327 = vsel %vm325, 1, 0
      %v328 = vsel %vm326, 1, 0
      %v329 = vcombine.low %v327, %v328
      %v331 = vunpack.c.l.s4 1966171168
      %v332 = vunpack.c.0.s8 %v331
      %v333 = vlaneseq
      %v334 = vshrl.u32 %v333, 7
      %v335 = vsub.s32 %v332, %v334
      %v336 = vrot.slane %v329, %v335
      %v338 = vunpack.c.l.s4 1966171168
      %v339 = vunpack.c.0.s8 %v338
      %v340 = vlaneseq
      %v341 = vshrl.u32 %v340, 7
      %v342 = vsub.s32 %v339, %v341
      %v343 = vrot.slane %v336, %v342
      %vm344 = vcmp.ne.s32.totalorder %v343, 0
      %vm345 = vmand %vm324, %vm344
      %v346 = vsub.f32 %v289, %v310
      %v347 = vsub.f32 %v290, %v316
      %v350 = vcombine.low %v346, %v347
      %v352 = vunpack.c.l.s4 1966171168
      %v353 = vunpack.c.0.s8 %v352
      %v354 = vlaneseq
      %v355 = vshrl.u32 %v354, 7
      %v356 = vsub.s32 %v353, %v355
      %v357 = vrot.slane %v350, %v356
      %v359 = vunpack.c.l.s4 1966171168
      %v360 = vunpack.c.0.s8 %v359
      %v361 = vlaneseq
      %v362 = vshrl.u32 %v361, 7
      %v363 = vsub.s32 %v360, %v362
      %v364 = vrot.slane %v357, %v363
      %v366 = vsel %vm345, %v364, 0.0
      %v367 = vld [vmem:[%s236] sm:$0x3]
      %v368 = vadd.f32 %v367, %v366
      %v369 = vlaneseq
      %vm370 = vcmp.ge.s32.totalorder %v369, 0
      %vm371 = vcmp.lt.s32.totalorder %v369, 256
      %vm372 = vmand %vm370, %vm371
      %373 = vst.msk [vmem:[%s236] sm:$0x3] %vm372, %v368
      %v374 = vld [vmem:[%s240] sm:$0x3]
      %v375 = vsel %vm345, 1, 0
      %v376 = vcvt.s32.f32 %v375
      %v377 = vadd.f32 %v374, %v376
      %378 = vst.msk [vmem:[%s240] sm:$0x3] %vm372, %v377
      %p379 = scmp.lt.s32.totalorder %s19, 1
      %s380 = scalar_select %p379, %s19, 1
      %s381 = smul.addr %s380, 2
      %s382 = scalar_lea.vmem %s2, %s381
      %p383 = scmp.lt.s32.totalorder %s19, 1
      %s384 = scalar_select %p383, %s19, 1
      %s385 = smul.addr %s384, 2
      %s386 = scalar_lea.vmem %s3, %s385
      // Predicated region
      $region33: #{_ddrnet_ce.3} parent=27 // pred_check
        %p387 = pneg %p101
      $region34: #{_ddrnet_ce.3} parent=27 // pred_check_branch
        %389 = sbr.rel (%p387) target = $region36
      $region35: #{_ddrnet_ce.3} parent=27 // pred_region
        _
      $region36: #{_ddrnet_ce.3} parent=27 // pred_fallthru
        _
      // Predicated region
      $region37: #{_ddrnet_ce.3} parent=27 // pred_check
        %p390 = pneg %p127
      $region38: #{_ddrnet_ce.3} parent=27 // pred_check_branch
        %392 = sbr.rel (%p390) target = $region40
      $region39: #{_ddrnet_ce.3} parent=27 // pred_region
        _
      $region40: #{_ddrnet_ce.3} parent=27 // pred_fallthru
        _
    $region28: #{_ddrnet_ce.3} parent=5 // pred_fallthru
      _
    %p393 = scmp.le.s32.totalorder 2, %s10
    // Predicated region
    $region41: #{_ddrnet_ce.3} parent=5 // pred_check
      %p394 = pneg %p393
    $region42: #{_ddrnet_ce.3} parent=5 // pred_check_branch
      %396 = sbr.rel (%p394) target = $region44
    $region43: #{_ddrnet_ce.3} parent=5 // pred_region
      %s397 = ssub.s32 %s10, 2
      // Predicated region
      $region45: #{_ddrnet_ce.3} parent=43 // pred_check
        %p398 = pneg %p107
      $region46: #{_ddrnet_ce.3} parent=43 // pred_check_branch
        %400 = sbr.rel (%p398) target = $region48
      $region47: #{_ddrnet_ce.3} parent=43 // pred_region
        %p401 = scmp.lt.s32.totalorder %s21, 1
        %s402 = scalar_select %p401, %s21, 1
        %s403 = smul.addr %s402, 2
        %s404 = scalar_lea.vmem %s2, %s403
      $region48: #{_ddrnet_ce.3} parent=43 // pred_fallthru
        _
      // Predicated region
      $region49: #{_ddrnet_ce.3} parent=43 // pred_check
        %p405 = pneg %p133
      $region50: #{_ddrnet_ce.3} parent=43 // pred_check_branch
        %407 = sbr.rel (%p405) target = $region52
      $region51: #{_ddrnet_ce.3} parent=43 // pred_region
        %p408 = scmp.lt.s32.totalorder %s21, 1
        %s409 = scalar_select %p408, %s21, 1
        %s410 = smul.addr %s409, 2
        %s411 = scalar_lea.vmem %s3, %s410
      $region52: #{_ddrnet_ce.3} parent=43 // pred_fallthru
        _
    $region44: #{_ddrnet_ce.3} parent=5 // pred_fallthru
      _
  $region6: #{_ddrnet_ce.3} parent=0 // loop_footer
    %s14 = sadd.s32 1, %s10
  $region7: #{_ddrnet_ce.3} parent=0 // loop_footer_branch
    %9 = sbr.rel target = $region3
  $region8: #{_ddrnet_ce.3} parent=0 // loop_exit
    _

</llo_original>
